<compile_context>
chip_gen: v7x
topology: tpu7x:2x2x1
jax: 0.10.0
libtpu: 0.0.40
codegen_flags: <defaults>
</compile_context>

<pallas_src>
import functools

import jax
import jax.numpy as jnp
from jax.experimental import pallas as pl
from jax.experimental.pallas import tpu as pltpu


def mlp_loss_kernel(x_ref, t_ref, w1_ref, b1_ref, w2_ref, b2_ref,
                    logits_ref, loss_part_ref, *, block_m, valid_batch):
    # fc1 + ReLU  (MXU matmul with f32 accumulation, VPU max)
    x = x_ref[...]
    h = jnp.dot(x, w1_ref[...], preferred_element_type=jnp.float32) + b1_ref[...]
    h = jnp.maximum(h, 0.0)

    # fc2 -> lane-dense logits tile (padded output columns are exactly zero)
    logits = jnp.dot(h, w2_ref[...], preferred_element_type=jnp.float32) + b2_ref[...]
    logits_ref[...] = logits.astype(logits_ref.dtype)

    # Per-tile partial MSE numerator. Mask rows that are batch padding; padded
    # feature columns are already 0 - 0 = 0 so they contribute nothing.
    out_p = logits.shape[-1]
    row = (jax.lax.broadcasted_iota(jnp.int32, (block_m, out_p), 0)
           + pl.program_id(0) * block_m)
    diff = jnp.where(row < valid_batch, logits - t_ref[...], 0.0)
    # Scalar partial sum -> SMEM output (no masked VMEM partial store).
    loss_part_ref[0, 0] = jnp.sum(diff * diff)


def _round_up(x, m):
    return ((x + m - 1) // m) * m


def model_with_loss(x, w1, b1, w2, b2, targets, *, block_m=512):
    """Returns (logits, loss). Forward + MSE computed inside one Pallas kernel."""
    batch, in_dim = x.shape
    hidden = w1.shape[1]
    out_dim = w2.shape[1]
    f32 = jnp.float32

    # Lane-dense padding of feature dims (zeros keep the math exact).
    hid_p = _round_up(hidden, 128)
    out_p = _round_up(out_dim, 128)

    # Batch tiling: multiple of 8 sublanes, capped at the (padded) batch.
    block_m = max(8, min(block_m, _round_up(batch, 8)))
    batch_p = _round_up(batch, block_m)
    num_tiles = batch_p // block_m

    xp = jnp.zeros((batch_p, in_dim), f32).at[:batch].set(x.astype(f32))
    tp = jnp.zeros((batch_p, out_p), f32).at[:batch, :out_dim].set(targets.astype(f32))
    w1p = jnp.zeros((in_dim, hid_p), f32).at[:, :hidden].set(w1.astype(f32))
    b1p = jnp.zeros((1, hid_p), f32).at[:, :hidden].set(b1.reshape(1, hidden).astype(f32))
    w2p = jnp.zeros((hid_p, out_p), f32).at[:hidden, :out_dim].set(w2.astype(f32))
    b2p = jnp.zeros((1, out_p), f32).at[:, :out_dim].set(b2.reshape(1, out_dim).astype(f32))

    kernel = functools.partial(mlp_loss_kernel, block_m=block_m, valid_batch=batch)

    resident = lambda i: (0, 0)          # weights/biases: same block every step

    logits_p, loss_parts = pl.pallas_call(
        kernel,
        grid=(num_tiles,),
        in_specs=[
            pl.BlockSpec((block_m, in_dim), lambda i: (i, 0)),   # x tile
            pl.BlockSpec((block_m, out_p), lambda i: (i, 0)),    # targets tile
            pl.BlockSpec((in_dim, hid_p), resident),             # w1 (resident)
            pl.BlockSpec((1, hid_p), resident),                  # b1 (resident)
            pl.BlockSpec((hid_p, out_p), resident),              # w2 (resident)
            pl.BlockSpec((1, out_p), resident),                  # b2 (resident)
        ],
        out_specs=(
            pl.BlockSpec((block_m, out_p), lambda i: (i, 0)),    # lane-dense logits
            pl.BlockSpec((1, 1), lambda i: (i, 0),               # per-tile loss partial
                         memory_space=pltpu.MemorySpace.SMEM),
        ),
        out_shape=(
            jax.ShapeDtypeStruct((batch_p, out_p), f32),
            jax.ShapeDtypeStruct((num_tiles, 1), f32),
        ),
        compiler_params=pltpu.CompilerParams(
            dimension_semantics=("parallel",),        # no carry: partials per tile
            vmem_limit_bytes=32 * 1024 * 1024,        # explicit, safe on v5e/v6e/v7x
        ),
    )(xp, tp, w1p, b1p, w2p, b2p)

    logits = logits_p[:batch, :out_dim]
    loss = jnp.sum(loss_parts) / jnp.float32(batch * out_dim)
    return logits, loss


def make_params(key, input_dim=10, hidden_dim=5, output_dim=1):
    """Deterministic parameter init matching nn.Linear shapes (stored transposed)."""
    k1, k2, k3, k4 = jax.random.split(key, 4)
    w1 = jax.random.normal(k1, (input_dim, hidden_dim), jnp.float32) * 0.1
    b1 = jax.random.normal(k2, (1, hidden_dim), jnp.float32) * 0.1
    w2 = jax.random.normal(k3, (hidden_dim, output_dim), jnp.float32) * 0.1
    b2 = jax.random.normal(k4, (1, output_dim), jnp.float32) * 0.1
    return w1, b1, w2, b2


if __name__ == "__main__":
    input_dim, hidden_dim, output_dim = 10, 5, 1
    batch = 8

    key = jax.random.PRNGKey(0)
    kp, kx, kt = jax.random.split(key, 3)

    w1, b1, w2, b2 = make_params(kp, input_dim, hidden_dim, output_dim)
    x = jax.random.normal(kx, (batch, input_dim), jnp.float32)
    targets = jax.random.normal(kt, (batch, output_dim), jnp.float32)

    logits, loss = jax.jit(model_with_loss)(x, w1, b1, w2, b2, targets)
    jax.block_until_ready((logits, loss))

    # Reference check in plain JAX (same math as the PyTorch forward).
    h_ref = jnp.maximum(x @ w1 + b1, 0.0)
    logits_ref = h_ref @ w2 + b2
    loss_ref = jnp.mean((logits_ref - targets) ** 2)
    assert jnp.allclose(logits, logits_ref, atol=1e-5), "logits mismatch"
    assert jnp.allclose(loss, loss_ref, atol=1e-5), "loss mismatch"

    print("KERNEL_OK")
</pallas_src>

<mosaic_0001>
module attributes {stable_mosaic.version = 11 : i64} {
  func.func @mlp_loss_kernel(%arg0: i32, %arg1: memref<8x10xf32, #tpu.memory_space<vmem>>, %arg2: memref<8x128xf32, #tpu.memory_space<vmem>>, %arg3: memref<10x128xf32, #tpu.memory_space<vmem>>, %arg4: memref<1x128xf32, #tpu.memory_space<vmem>>, %arg5: memref<128x128xf32, #tpu.memory_space<vmem>>, %arg6: memref<1x128xf32, #tpu.memory_space<vmem>>, %arg7: memref<8x128xf32, #tpu.memory_space<vmem>>, %arg8: memref<1x1xf32, #tpu.memory_space<smem>>) attributes {dimension_semantics = [#tpu.dimension_semantics<parallel>], iteration_bounds = array<i64: 1>, scalar_prefetch = 0 : i64, scratch_operands = 0 : i64, tpu.core_type = #tpu.core_type<tc>, window_params = [{transform_indices = @transform_0, window_bounds = array<i64: 8, 10>}, {transform_indices = @transform_1, window_bounds = array<i64: 8, 128>}, {pipeline_mode = #tpu.pipeline_mode<synchronous>, transform_indices = @transform_2, window_bounds = array<i64: 10, 128>}, {pipeline_mode = #tpu.pipeline_mode<synchronous>, transform_indices = @transform_3, window_bounds = array<i64: 1, 128>}, {pipeline_mode = #tpu.pipeline_mode<synchronous>, transform_indices = @transform_4, window_bounds = array<i64: 128, 128>}, {pipeline_mode = #tpu.pipeline_mode<synchronous>, transform_indices = @transform_5, window_bounds = array<i64: 1, 128>}, {transform_indices = @transform_6, window_bounds = array<i64: 8, 128>}, {transform_indices = @transform_7, window_bounds = array<i64: 1, 1>}]} {
    %c0 = arith.constant 0 : index
    %c0_0 = arith.constant 0 : index
    %0 = vector.load %arg1[%c0, %c0_0] : memref<8x10xf32, #tpu.memory_space<vmem>>, vector<8x10xf32>
    %c0_1 = arith.constant 0 : index
    %c0_2 = arith.constant 0 : index
    %1 = vector.load %arg3[%c0_1, %c0_2] : memref<10x128xf32, #tpu.memory_space<vmem>>, vector<10x128xf32>
    %cst = arith.constant dense<0.000000e+00> : vector<8x128xf32>
    %2 = tpu.matmul %0, %1, %cst {dimension_numbers = #tpu.dot_dimension_numbers<[1], [0], [0], [1], [0, 0, 1, 1], [], []>} : vector<8x10xf32>, vector<10x128xf32>, vector<8x128xf32> -> vector<8x128xf32>
    %c0_3 = arith.constant 0 : index
    %c0_4 = arith.constant 0 : index
    %3 = vector.load %arg4[%c0_3, %c0_4] : memref<1x128xf32, #tpu.memory_space<vmem>>, vector<1x128xf32>
    %4 = vector.broadcast %3 : vector<1x128xf32> to vector<8x128xf32>
    %5 = arith.addf %2, %4 : vector<8x128xf32>
    %cst_5 = arith.constant 0.000000e+00 : f32
    %6 = vector.broadcast %cst_5 : f32 to vector<8x128xf32>
    %7 = arith.maximumf %5, %6 : vector<8x128xf32>
    %c0_6 = arith.constant 0 : index
    %c0_7 = arith.constant 0 : index
    %8 = vector.load %arg5[%c0_6, %c0_7] : memref<128x128xf32, #tpu.memory_space<vmem>>, vector<128x128xf32>
    %cst_8 = arith.constant dense<0.000000e+00> : vector<8x128xf32>
    %9 = tpu.matmul %7, %8, %cst_8 {dimension_numbers = #tpu.dot_dimension_numbers<[1], [0], [0], [1], [0, 0, 1, 1], [], []>} : vector<8x128xf32>, vector<128x128xf32>, vector<8x128xf32> -> vector<8x128xf32>
    %c0_9 = arith.constant 0 : index
    %c0_10 = arith.constant 0 : index
    %10 = vector.load %arg6[%c0_9, %c0_10] : memref<1x128xf32, #tpu.memory_space<vmem>>, vector<1x128xf32>
    %11 = vector.broadcast %10 : vector<1x128xf32> to vector<8x128xf32>
    %12 = arith.addf %9, %11 : vector<8x128xf32>
    %c0_11 = arith.constant 0 : index
    %c0_12 = arith.constant 0 : index
    %13 = vector.load %arg7[%c0_11, %c0_12] : memref<8x128xf32, #tpu.memory_space<vmem>>, vector<8x128xf32>
    tpu.vector_store %arg7[%c0_11, %c0_12], %12 {strides = array<i32>} : memref<8x128xf32, #tpu.memory_space<vmem>>, vector<8x128xf32>,
    %14 = tpu.iota {dimensions = array<i32: 0>} : vector<8x128xi32>
    %c8_i32 = arith.constant 8 : i32
    %15 = arith.muli %arg0, %c8_i32 : i32
    %16 = vector.broadcast %15 : i32 to vector<8x128xi32>
    %17 = arith.addi %14, %16 : vector<8x128xi32>
    %c8_i32_13 = arith.constant 8 : i32
    %18 = vector.broadcast %c8_i32_13 : i32 to vector<8x128xi32>
    %19 = arith.cmpi slt, %17, %18 : vector<8x128xi32>
    %c0_14 = arith.constant 0 : index
    %c0_15 = arith.constant 0 : index
    %20 = vector.load %arg2[%c0_14, %c0_15] : memref<8x128xf32, #tpu.memory_space<vmem>>, vector<8x128xf32>
    %21 = arith.subf %12, %20 : vector<8x128xf32>
    %cst_16 = arith.constant 0.000000e+00 : f32
    %22 = vector.broadcast %cst_16 : f32 to vector<8x128xf32>
    %23 = arith.select %19, %21, %22 : vector<8x128xi1>, vector<8x128xf32>
    %24 = arith.mulf %23, %23 : vector<8x128xf32>
    %25 = vector.shape_cast %24 : vector<8x128xf32> to vector<1x8x128xf32>
    %cst_17 = arith.constant dense<0.000000e+00> : vector<1xf32>
    %26 = vector.multi_reduction <add>, %25, %cst_17 [1, 2] : vector<1x8x128xf32> to vector<1xf32>
    %27 = vector.shape_cast %26 : vector<1xf32> to vector<1x1x1xf32>
    %28 = vector.extract %27[0, 0, 0] : f32 from vector<1x1x1xf32>
    %c0_18 = arith.constant 0 : index
    %c0_19 = arith.constant 0 : index
    %29 = memref.load %arg8[%c0_18, %c0_19] : memref<1x1xf32, #tpu.memory_space<smem>>
    memref.store %28, %arg8[%c0_18, %c0_19] : memref<1x1xf32, #tpu.memory_space<smem>>
    return
  }
  func.func @transform_0(%arg0: i32) -> (i32, i32) {
    %c0_i32 = arith.constant 0 : i32
    %c0_i32_0 = arith.constant 0 : i32
    return %arg0, %c0_i32 : i32, i32
  }
  func.func @transform_1(%arg0: i32) -> (i32, i32) {
    %c0_i32 = arith.constant 0 : i32
    %c0_i32_0 = arith.constant 0 : i32
    return %arg0, %c0_i32 : i32, i32
  }
  func.func @transform_2(%arg0: i32) -> (i32, i32) {
    %c0_i32 = arith.constant 0 : i32
    %c0_i32_0 = arith.constant 0 : i32
    %c0_i32_1 = arith.constant 0 : i32
    return %c0_i32, %c0_i32_0 : i32, i32
  }
  func.func @transform_3(%arg0: i32) -> (i32, i32) {
    %c0_i32 = arith.constant 0 : i32
    %c0_i32_0 = arith.constant 0 : i32
    %c0_i32_1 = arith.constant 0 : i32
    return %c0_i32, %c0_i32_0 : i32, i32
  }
  func.func @transform_4(%arg0: i32) -> (i32, i32) {
    %c0_i32 = arith.constant 0 : i32
    %c0_i32_0 = arith.constant 0 : i32
    %c0_i32_1 = arith.constant 0 : i32
    return %c0_i32, %c0_i32_0 : i32, i32
  }
  func.func @transform_5(%arg0: i32) -> (i32, i32) {
    %c0_i32 = arith.constant 0 : i32
    %c0_i32_0 = arith.constant 0 : i32
    %c0_i32_1 = arith.constant 0 : i32
    return %c0_i32, %c0_i32_0 : i32, i32
  }
  func.func @transform_6(%arg0: i32) -> (i32, i32) {
    %c0_i32 = arith.constant 0 : i32
    %c0_i32_0 = arith.constant 0 : i32
    return %arg0, %c0_i32 : i32, i32
  }
  func.func @transform_7(%arg0: i32) -> (i32, i32) {
    %c0_i32 = arith.constant 0 : i32
    %c0_i32_0 = arith.constant 0 : i32
    return %arg0, %c0_i32 : i32, i32
  }
}

</mosaic_0001>

<llo_original>
// kernel: model_with_loss.1
$region0: #{model_with_loss.1}
  #allocation0 [shape = 'u32[]', space=smem, size = 0x4, offset = 0x4, fixed_abs, tag = 'smem constant byte address 0x4 - core index']
  #allocation1 [shape = 'u32[144,128]{1,0:T(1,128)}', space=vmem, size = 0x12000, scoped, tag = 'internal scratch']
  %s0 = inlined_call_operand.vmem [shape: f32[8,10], index: 0, kind: input, shape index: {}]
  %s1 = inlined_call_operand.vmem [shape: f32[8,128], index: 1, kind: input, shape index: {}]
  %s2 = inlined_call_operand.vmem [shape: f32[10,128], index: 2, kind: input, shape index: {}]
  %s3 = inlined_call_operand.vmem [shape: f32[1,128], index: 3, kind: input, shape index: {}]
  %s4 = inlined_call_operand.vmem [shape: f32[128,128], index: 4, kind: input, shape index: {}]
  %s5 = inlined_call_operand.vmem [shape: f32[1,128], index: 5, kind: input, shape index: {}]
  %s6 = inlined_call_operand.vmem [shape: f32[8,128], index: 6, kind: output, shape index: {0}]
  %s7 = inlined_call_operand.hbm [shape: f32[1,1], index: 7, kind: output, shape index: {1}]
  %8 = xla_tuple %s6, %s7
  %s9 = sld [smem:[#allocation0]]
  $region42: #{model_with_loss.1} parent=0
    _
  %s11 = ssub.s32 1, %s9
  %s12 = scalar_select 0, %s11, %s9
  $region1: #{model_with_loss.1} parent=0
    #allocation2 [shape = 'u8[512]{0}', space=smem, size = 0x200, scoped, tag = 'output window, operand 1, single buffered']
    #allocation3 [shape = 's32[1]{0}', space=sflag, size = 0x4, scoped, tag = 'scoped memory for model_with_loss.1']
    %13 = vsyncpa [#allocation3], 0
    // Predicated region
    $region2: #{model_with_loss.1} parent=1 // pred_check
      _
    $region3: #{model_with_loss.1} parent=1 // pred_check_branch
      %15 = sbr.rel (0) target = $region5
    $region4: #{model_with_loss.1} parent=1 // pred_region
      _
    $region5: #{model_with_loss.1} parent=1 // pred_fallthru
      _
    // Predicated region
    $region6: #{model_with_loss.1} parent=1 // pred_check
      _
    $region7: #{model_with_loss.1} parent=1 // pred_check_branch
      %17 = sbr.rel (0) target = $region9
    $region8: #{model_with_loss.1} parent=1 // pred_region
      _
    $region9: #{model_with_loss.1} parent=1 // pred_fallthru
      _
    // Predicated region
    $region10: #{model_with_loss.1} parent=1 // pred_check
      _
    $region11: #{model_with_loss.1} parent=1 // pred_check_branch
      %19 = sbr.rel (0) target = $region13
    $region12: #{model_with_loss.1} parent=1 // pred_region
      _
    $region13: #{model_with_loss.1} parent=1 // pred_fallthru
      _
    // Predicated region
    $region14: #{model_with_loss.1} parent=1 // pred_check
      _
    $region15: #{model_with_loss.1} parent=1 // pred_check_branch
      %21 = sbr.rel (0) target = $region17
    $region16: #{model_with_loss.1} parent=1 // pred_region
      _
    $region17: #{model_with_loss.1} parent=1 // pred_fallthru
      _
    // Predicated region
    $region18: #{model_with_loss.1} parent=1 // pred_check
      _
    $region19: #{model_with_loss.1} parent=1 // pred_check_branch
      %23 = sbr.rel (0) target = $region21
    $region20: #{model_with_loss.1} parent=1 // pred_region
      _
    $region21: #{model_with_loss.1} parent=1 // pred_fallthru
      _
    // Predicated region
    $region22: #{model_with_loss.1} parent=1 // pred_check
      _
    $region23: #{model_with_loss.1} parent=1 // pred_check_branch
      %25 = sbr.rel (0) target = $region25
    $region24: #{model_with_loss.1} parent=1 // pred_region
      _
    $region25: #{model_with_loss.1} parent=1 // pred_fallthru
      _
    %v26 = vld [vmem:[%s0] sm:$0xff]
    %v27 = vld [vmem:[%s2] sm:$0xff]
    %v28 = vld [vmem:[%s2 + $0x8] sm:$0x3]
    %v29 = vld [vmem:[%s3] sm:$0x1]
    %v31 = vlaneseq
    %v32 = vshrl.u32 %v31, 7
    %v33 = vsub.s32 0, %v32
    %v34 = vrot.slane %v29, %v33
    %vm36 = vcmask 80896
    %v38 = vsel %vm36, %v26, 0
    %vm40 = vcmask 1041408
    %v42 = vsel %vm40, %v28, 0
    %44 = vmatprep.subr.mxu0 0.0
    %45 = vmatpush1.msra.mxu0 %v27
    %46 = vmatprep.subr.mxu0 0.0
    %47 = vmatpush1.msra.mxu0 %v42
    %48 = vmatprep.subr.mxu0 0.0
    %49 = vmatpush1.msra.mxu0 0.0
    %50 = vmatprep.subr.mxu0 0.0
    %51 = vmatpush1.msra.mxu0 0.0
    %52 = vmatprep.subr.mxu0 0.0
    %53 = vmatpush1.msra.mxu0 0.0
    %54 = vmatprep.subr.mxu0 0.0
    %55 = vmatpush1.msra.mxu0 0.0
    %56 = vmatprep.subr.mxu0 0.0
    %57 = vmatpush1.msra.mxu0 0.0
    %58 = vmatprep.subr.mxu0 0.0
    %59 = vmatpush1.msra.mxu0 0.0
    %60 = vmatprep.subr.mxu0 0.0
    %61 = vmatpush1.msra.mxu0 0.0
    %62 = vmatprep.subr.mxu0 0.0
    %63 = vmatpush1.msra.mxu0 0.0
    %64 = vmatprep.subr.mxu0 0.0
    %65 = vmatpush1.msra.mxu0 0.0
    %66 = vmatprep.subr.mxu0 0.0
    %67 = vmatpush1.msra.mxu0 0.0
    %68 = vmatprep.subr.mxu0 0.0
    %69 = vmatpush1.msra.mxu0 0.0
    %70 = vmatprep.subr.mxu0 0.0
    %71 = vmatpush1.msra.mxu0 0.0
    %72 = vmatprep.subr.mxu0 0.0
    %73 = vmatpush1.msra.mxu0 0.0
    %74 = vmatprep.subr.mxu0 0.0
    %75 = vmatpush1.msra.mxu0 0.0
    %76 = vmatprep.subr.mxu0 0.0
    %77 = vmatpush1.msra.mxu0 0.0
    %78 = vmatprep.subr.mxu0 0.0
    %79 = vmatpush1.msra.mxu0 0.0
    %80 = vmatprep.subr.mxu0 0.0
    %81 = vmatpush1.msra.mxu0 0.0
    %82 = vmatprep.subr.mxu0 0.0
    %83 = vmatpush1.msra.mxu0 0.0
    %84 = vmatprep.subr.mxu0 0.0
    %85 = vmatpush1.msra.mxu0 0.0
    %86 = vmatprep.subr.mxu0 0.0
    %87 = vmatpush1.msra.mxu0 0.0
    %88 = vmatprep.subr.mxu0 0.0
    %89 = vmatpush1.msra.mxu0 0.0
    %90 = vmatprep.subr.mxu0 0.0
    %91 = vmatpush1.msra.mxu0 0.0
    %92 = vmatprep.subr.mxu0 0.0
    %93 = vmatpush1.msra.mxu0 0.0
    %94 = vmatprep.subr.mxu0 0.0
    %95 = vmatpush1.msra.mxu0 0.0
    %96 = vmatprep.subr.mxu0 0.0
    %97 = vmatpush1.msra.mxu0 0.0
    %98 = vmatprep.subr.mxu0 0.0
    %99 = vmatpush1.msra.mxu0 0.0
    %100 = vmatprep.subr.mxu0 0.0
    %101 = vmatpush1.msra.mxu0 0.0
    %102 = vmatprep.subr.mxu0 0.0
    %103 = vmatpush1.msra.mxu0 0.0
    %104 = vmatprep.subr.mxu0 0.0
    %105 = vmatpush1.msra.mxu0 0.0
    %106 = vmatprep.subr.mxu0 0.0
    %107 = vmatpush1.msra.mxu0 0.0
    %108 = vmatprep.mubr.f32.mxu0 0.0
    %109 = vmatmul.mubr.f32.gmra.mrb[0].mxu0 %v38
    %v110 = vpop.f32.mrb[0].mxu0
    %v111 = vadd.f32 %v34, %v110
    %v112 = vpop.f32.mrb[0].mxu0
    %113 = vdwg.mxu0
    %v114 = vmax.f32 %v111, 0.0
    %v115 = vld [vmem:[%s4] sm:$0xff]
    %v116 = vld [vmem:[%s4 + $0x8] sm:$0xff]
    %v117 = vld [vmem:[%s4 + $0x10] sm:$0xff]
    %v118 = vld [vmem:[%s4 + $0x18] sm:$0xff]
    %v119 = vld [vmem:[%s4 + $0x20] sm:$0xff]
    %v120 = vld [vmem:[%s4 + $0x28] sm:$0xff]
    %v121 = vld [vmem:[%s4 + $0x30] sm:$0xff]
    %v122 = vld [vmem:[%s4 + $0x38] sm:$0xff]
    %v123 = vld [vmem:[%s4 + $0x40] sm:$0xff]
    %v124 = vld [vmem:[%s4 + $0x48] sm:$0xff]
    %v125 = vld [vmem:[%s4 + $0x50] sm:$0xff]
    %v126 = vld [vmem:[%s4 + $0x58] sm:$0xff]
    %v127 = vld [vmem:[%s4 + $0x60] sm:$0xff]
    %v128 = vld [vmem:[%s4 + $0x68] sm:$0xff]
    %v129 = vld [vmem:[%s4 + $0x70] sm:$0xff]
    %v130 = vld [vmem:[%s4 + $0x78] sm:$0xff]
    %v131 = vld [vmem:[%s5] sm:$0x1]
    %v133 = vlaneseq
    %v134 = vshrl.u32 %v133, 7
    %v135 = vsub.s32 0, %v134
    %v136 = vrot.slane %v131, %v135
    %138 = vmatprep.subr.mxu0 0.0
    %139 = vmatpush1.msra.mxu0 %v115
    %140 = vmatprep.subr.mxu0 0.0
    %141 = vmatpush1.msra.mxu0 %v116
    %142 = vmatprep.subr.mxu0 0.0
    %143 = vmatpush1.msra.mxu0 %v117
    %144 = vmatprep.subr.mxu0 0.0
    %145 = vmatpush1.msra.mxu0 %v118
    %146 = vmatprep.subr.mxu0 0.0
    %147 = vmatpush1.msra.mxu0 %v119
    %148 = vmatprep.subr.mxu0 0.0
    %149 = vmatpush1.msra.mxu0 %v120
    %150 = vmatprep.subr.mxu0 0.0
    %151 = vmatpush1.msra.mxu0 %v121
    %152 = vmatprep.subr.mxu0 0.0
    %153 = vmatpush1.msra.mxu0 %v122
    %154 = vmatprep.subr.mxu0 0.0
    %155 = vmatpush1.msra.mxu0 %v123
    %156 = vmatprep.subr.mxu0 0.0
    %157 = vmatpush1.msra.mxu0 %v124
    %158 = vmatprep.subr.mxu0 0.0
    %159 = vmatpush1.msra.mxu0 %v125
    %160 = vmatprep.subr.mxu0 0.0
    %161 = vmatpush1.msra.mxu0 %v126
    %162 = vmatprep.subr.mxu0 0.0
    %163 = vmatpush1.msra.mxu0 %v127
    %164 = vmatprep.subr.mxu0 0.0
    %165 = vmatpush1.msra.mxu0 %v128
    %166 = vmatprep.subr.mxu0 0.0
    %167 = vmatpush1.msra.mxu0 %v129
    %168 = vmatprep.subr.mxu0 0.0
    %169 = vmatpush1.msra.mxu0 %v130
    %170 = vmatprep.subr.mxu0 0.0
    %171 = vmatpush1.msra.mxu0 0.0
    %172 = vmatprep.subr.mxu0 0.0
    %173 = vmatpush1.msra.mxu0 0.0
    %174 = vmatprep.subr.mxu0 0.0
    %175 = vmatpush1.msra.mxu0 0.0
    %176 = vmatprep.subr.mxu0 0.0
    %177 = vmatpush1.msra.mxu0 0.0
    %178 = vmatprep.subr.mxu0 0.0
    %179 = vmatpush1.msra.mxu0 0.0
    %180 = vmatprep.subr.mxu0 0.0
    %181 = vmatpush1.msra.mxu0 0.0
    %182 = vmatprep.subr.mxu0 0.0
    %183 = vmatpush1.msra.mxu0 0.0
    %184 = vmatprep.subr.mxu0 0.0
    %185 = vmatpush1.msra.mxu0 0.0
    %186 = vmatprep.subr.mxu0 0.0
    %187 = vmatpush1.msra.mxu0 0.0
    %188 = vmatprep.subr.mxu0 0.0
    %189 = vmatpush1.msra.mxu0 0.0
    %190 = vmatprep.subr.mxu0 0.0
    %191 = vmatpush1.msra.mxu0 0.0
    %192 = vmatprep.subr.mxu0 0.0
    %193 = vmatpush1.msra.mxu0 0.0
    %194 = vmatprep.subr.mxu0 0.0
    %195 = vmatpush1.msra.mxu0 0.0
    %196 = vmatprep.subr.mxu0 0.0
    %197 = vmatpush1.msra.mxu0 0.0
    %198 = vmatprep.subr.mxu0 0.0
    %199 = vmatpush1.msra.mxu0 0.0
    %200 = vmatprep.subr.mxu0 0.0
    %201 = vmatpush1.msra.mxu0 0.0
    %202 = vmatprep.mubr.f32.mxu0 0.0
    %203 = vmatmul.mubr.f32.gmra.mrb[0].mxu0 %v114
    %v204 = vpop.f32.mrb[0].mxu0
    %v205 = vadd.f32 %v136, %v204
    %v206 = vpop.f32.mrb[0].mxu0
    %207 = vdwg.mxu0
    %208 = vst [vmem:[%s6] sm:$0xff] %v205
    %v209 = vlaneseq
    %v210 = vshrl.u32 %v209, 7
    %s211 = smul.u32 0, 8
    %v212 = vstv %s211
    %v213 = vadd.s32 %v210, %v212
    %vm214 = vcmp.lt.s32.totalorder %v213, 8
    %v215 = vld [vmem:[%s1] sm:$0xff]
    %v216 = vsub.f32 %v205, %v215
    %v217 = vsel %vm214, %v216, 0.0
    %v218 = vmul.f32 %v217, %v217
    %219 = vadd.xlane.f32.xlu0 %v218
    %v220 = vpop.xlane.xlu0 %219
    %v221 = vrot.slane %v220, 4
    %v222 = vadd.f32 %v220, %v221
    %v223 = vrot.slane %v222, 2
    %v224 = vadd.f32 %v222, %v223
    %v225 = vrot.slane %v224, 1
    %v226 = vadd.f32 %v224, %v225
    %s227 = vtos %v226
    %s228 = scalar_lea.smem [#allocation2], 0
    %229 = sst [smem:[%s228]] %s227
    // Predicated region
    $region26: #{model_with_loss.1} parent=1 // pred_check
      _
    $region27: #{model_with_loss.1} parent=1 // pred_check_branch
      %231 = sbr.rel (0) target = $region29
    $region28: #{model_with_loss.1} parent=1 // pred_region
      _
    $region29: #{model_with_loss.1} parent=1 // pred_fallthru
      _
    // Predicated region
    $region30: #{model_with_loss.1} parent=1 // pred_check
      _
    $region31: #{model_with_loss.1} parent=1 // pred_check_branch
      %233 = sbr.rel (0) target = $region33
    $region32: #{model_with_loss.1} parent=1 // pred_region
      %s235 = ssub.s32 16, 16
      %236 = vsyncadd [#allocation3], %s235
      %239 = dma.smem_to_hbm [#allocation2], 16, %s7, [#allocation3]
    $region33: #{model_with_loss.1} parent=1 // pred_fallthru
      _
    // Predicated region
    $region34: #{model_with_loss.1} parent=1 // pred_check
      _
    $region35: #{model_with_loss.1} parent=1 // pred_check_branch
      %241 = sbr.rel (0) target = $region37
    $region36: #{model_with_loss.1} parent=1 // pred_region
      _
    $region37: #{model_with_loss.1} parent=1 // pred_fallthru
      _
    // Predicated region
    $region38: #{model_with_loss.1} parent=1 // pred_check
      _
    $region39: #{model_with_loss.1} parent=1 // pred_check_branch
      %243 = sbr.rel (0) target = $region41
    $region40: #{model_with_loss.1} parent=1 // pred_region
      %244 = dma.done [#allocation3], 16
    $region41: #{model_with_loss.1} parent=1 // pred_fallthru
      _
    %245 = sfence
    %246 = vsyncpa [#allocation3], 1

</llo_original>
